<compile_context>
chip_gen: v7x
topology: tpu7x:2x2x1
jax: 0.10.0
libtpu: 0.0.40
codegen_flags: <defaults>
</compile_context>

<pallas_src>
import functools

import jax
import jax.numpy as jnp
from jax.experimental import pallas as pl
from jax.experimental.pallas import tpu as pltpu


def _round_up(n, m):
    return ((n + m - 1) // m) * m


def _make_fused_mlp_kernel(out_valid):
    """Kernel over refs: (x, w0, b0, w1, b1, ..., wL, bL, out)."""

    def kernel(*refs):
        x_ref, o_ref = refs[0], refs[-1]
        wb = refs[1:-1]
        n_layers = len(wb) // 2

        h = x_ref[...].astype(jnp.float32)
        for i in range(n_layers):
            w = wb[2 * i][...]                   # bf16 (in, out)
            b = wb[2 * i + 1][...]               # f32  (1, out) -> broadcasts over rows
            # bf16 x bf16 MXU matmul, f32 accumulation; everything after stays f32.
            z = jnp.dot(h.astype(jnp.bfloat16), w,
                        preferred_element_type=jnp.float32) + b
            if i < n_layers - 1:
                h = jnp.maximum(z, 0.0)          # hidden layer: ReLU (f32, VPU)
            else:
                # Final layer: log_softmax over the first `out_valid` columns only.
                n_pad = z.shape[-1]
                if out_valid < n_pad:
                    col = jax.lax.broadcasted_iota(jnp.int32, z.shape, 1)
                    z = jnp.where(col < out_valid, z, jnp.float32(-1e30))
                m = jnp.max(z, axis=-1, keepdims=True)
                shifted = z - m
                lse = jnp.log(jnp.sum(jnp.exp(shifted), axis=-1, keepdims=True))
                o_ref[...] = (shifted - lse).astype(o_ref.dtype)

    return kernel


def init_params(key, input_size, output_size, hidden_layers):
    """Mirror nn.Linear's U(-1/sqrt(fan_in), 1/sqrt(fan_in)) init.

    Weights stored as (in, out) so the kernel computes x @ w + b
    (== PyTorch's x @ W.T + b with W shaped (out, in)).
    """
    dims = [input_size] + list(hidden_layers) + [output_size]
    params = []
    for i in range(len(dims) - 1):
        fan_in, fan_out = dims[i], dims[i + 1]
        key, kw, kb = jax.random.split(key, 3)
        bound = 1.0 / float(fan_in) ** 0.5
        w = jax.random.uniform(kw, (fan_in, fan_out), jnp.float32, -bound, bound)
        b = jax.random.uniform(kb, (fan_out,), jnp.float32, -bound, bound)
        params.append((w, b))
    return params


def pad_params(params):
    """Pad + cast weights once, outside the forward pass.

    - Weights -> bf16 (MXU inputs), biases stay f32.
    - fan_out of every layer padded to a multiple of 128 (lane-dense).
    - fan_in of every layer except the FIRST padded to match the previous
      layer's padded fan_out; layer 0 keeps the true input feature size so x
      can be passed unpadded.
    Zero padding is exact: padded hidden units are 0 after bias+ReLU and the
    padded output logits are masked inside the kernel.
    """
    padded = []
    for i, (w, b) in enumerate(params):
        fi, fo = w.shape
        fi_p = fi if i == 0 else _round_up(fi, 128)
        fo_p = _round_up(fo, 128)
        w_p = jnp.zeros((fi_p, fo_p), jnp.bfloat16).at[:fi, :fo].set(
            w.astype(jnp.bfloat16))
        b_p = jnp.zeros((1, fo_p), jnp.float32).at[0, :fo].set(
            b.astype(jnp.float32))
        padded.append((w_p, b_p))
    return padded


@functools.partial(jax.jit, static_argnames=("output_size", "single_buffer_weights"))
def forward(x, padded_params, *, output_size, single_buffer_weights=True):
    B, F = x.shape
    assert padded_params[0][0].shape[0] == F, "layer-0 fan_in must match x features"
    N_pad = padded_params[-1][0].shape[1]

    # Batch tile: whole batch for small B (block == full dim is always legal),
    # 512-row tiles for big B (256-multiple for the 2x256 MXU on v6e/v7x,
    # ~85% of HBM roofline in the mem-bound regime). Ragged last tile is a
    # Pallas partial block (OOB reads unspecified but per-row independent,
    # OOB writes dropped) -> no batch padding needed.
    TB = B if B <= 512 else 512
    grid = (pl.cdiv(B, TB),)

    def _wspec(shape):
        # Grid-invariant block: same tile every step, stays VMEM-resident.
        if single_buffer_weights:
            return pl.BlockSpec(shape, lambda i: (0, 0), pipeline_mode=pl.Buffered(1))
        return pl.BlockSpec(shape, lambda i: (0, 0))

    args = [x]
    in_specs = [pl.BlockSpec((TB, F), lambda i: (i, 0))]
    weight_bytes = 0
    for w, b in padded_params:
        args += [w, b]
        in_specs.append(_wspec(w.shape))
        in_specs.append(_wspec(b.shape))
        weight_bytes += w.size * w.dtype.itemsize + b.size * b.dtype.itemsize

    # VMEM budget: weights (x1 or x2 buffers) + double-buffered x/out tiles +
    # a few f32 activation intermediates; 2x headroom, clamped to [32, 64] MiB
    # so the limit is valid on v5e/v6e (128 MiB) and v7x (64 MiB/TC).
    wbuf = 1 if single_buffer_weights else 2
    max_feat = max(max(w.shape[1] for w, _ in padded_params), F)
    footprint = (wbuf * weight_bytes
                 + 2 * TB * F * x.dtype.itemsize
                 + 2 * TB * N_pad * 4
                 + 4 * TB * max_feat * 4)
    vmem_limit = int(min(max(2 * footprint, 32 << 20), 64 << 20))

    out = pl.pallas_call(
        _make_fused_mlp_kernel(output_size),
        out_shape=jax.ShapeDtypeStruct((B, N_pad), jnp.float32),
        grid=grid,
        in_specs=in_specs,
        out_specs=pl.BlockSpec((TB, N_pad), lambda i: (i, 0)),
        compiler_params=pltpu.CompilerParams(
            dimension_semantics=("parallel",),
            vmem_limit_bytes=vmem_limit,
        ),
    )(*args)

    if N_pad == output_size:
        return out
    return out[:, :output_size]


def reference_forward(x, params):
    h = x
    for w, b in params[:-1]:
        h = jax.nn.relu(h @ w + b)
    w, b = params[-1]
    return jax.nn.log_softmax(h @ w + b, axis=1)


if __name__ == "__main__":
    key = jax.random.PRNGKey(0)

    batch = 8
    input_size = 32
    hidden_layers = [64, 32]
    output_size = 16

    kx, kp = jax.random.split(key)
    x = jax.random.normal(kx, (batch, input_size), jnp.float32)
    params = init_params(kp, input_size, output_size, hidden_layers)
    padded = pad_params(params)

    try:
        out = forward(x, padded, output_size=output_size, single_buffer_weights=True)
        out = jax.block_until_ready(out)
    except Exception:
        # Fallback if this jax version rejects single-buffered (Buffered(1))
        # grid-invariant blocks: default double-buffered weight blocks.
        out = forward(x, padded, output_size=output_size, single_buffer_weights=False)
        out = jax.block_until_ready(out)

    assert out.shape == (batch, output_size)
    # log_softmax rows should sum (in prob space) to ~1
    row_sums = jnp.sum(jnp.exp(out), axis=1)
    assert jnp.allclose(row_sums, 1.0, atol=1e-4)
    # match the pure-f32 JAX reference (bf16 MXU inputs -> slightly looser tol)
    ref = reference_forward(x, params)
    assert jnp.allclose(out, ref, atol=2e-2, rtol=2e-2)

    print("KERNEL_OK")
</pallas_src>

<mosaic_0001>
module attributes {stable_mosaic.version = 11 : i64} {
  func.func @kernel(%arg0: i32, %arg1: memref<8x32xf32, #tpu.memory_space<vmem>>, %arg2: memref<32x128xbf16, #tpu.memory_space<vmem>>, %arg3: memref<1x128xf32, #tpu.memory_space<vmem>>, %arg4: memref<128x128xbf16, #tpu.memory_space<vmem>>, %arg5: memref<1x128xf32, #tpu.memory_space<vmem>>, %arg6: memref<128x128xbf16, #tpu.memory_space<vmem>>, %arg7: memref<1x128xf32, #tpu.memory_space<vmem>>, %arg8: memref<8x128xf32, #tpu.memory_space<vmem>>) attributes {dimension_semantics = [#tpu.dimension_semantics<parallel>], iteration_bounds = array<i64: 1>, scalar_prefetch = 0 : i64, scratch_operands = 0 : i64, tpu.core_type = #tpu.core_type<tc>, window_params = [{transform_indices = @transform_0, window_bounds = array<i64: 8, 32>}, {pipeline_mode = #tpu.pipeline_mode<synchronous>, transform_indices = @transform_1, window_bounds = array<i64: 32, 128>}, {pipeline_mode = #tpu.pipeline_mode<synchronous>, transform_indices = @transform_2, window_bounds = array<i64: 1, 128>}, {pipeline_mode = #tpu.pipeline_mode<synchronous>, transform_indices = @transform_3, window_bounds = array<i64: 128, 128>}, {pipeline_mode = #tpu.pipeline_mode<synchronous>, transform_indices = @transform_4, window_bounds = array<i64: 1, 128>}, {pipeline_mode = #tpu.pipeline_mode<synchronous>, transform_indices = @transform_5, window_bounds = array<i64: 128, 128>}, {pipeline_mode = #tpu.pipeline_mode<synchronous>, transform_indices = @transform_6, window_bounds = array<i64: 1, 128>}, {transform_indices = @transform_7, window_bounds = array<i64: 8, 128>}]} {
    %c0 = arith.constant 0 : index
    %c0_0 = arith.constant 0 : index
    %0 = vector.load %arg1[%c0, %c0_0] : memref<8x32xf32, #tpu.memory_space<vmem>>, vector<8x32xf32>
    %c0_1 = arith.constant 0 : index
    %c0_2 = arith.constant 0 : index
    %1 = vector.load %arg2[%c0_1, %c0_2] : memref<32x128xbf16, #tpu.memory_space<vmem>>, vector<32x128xbf16>
    %c0_3 = arith.constant 0 : index
    %c0_4 = arith.constant 0 : index
    %2 = vector.load %arg3[%c0_3, %c0_4] : memref<1x128xf32, #tpu.memory_space<vmem>>, vector<1x128xf32>
    %3 = arith.truncf %0 : vector<8x32xf32> to vector<8x32xbf16>
    %cst = arith.constant dense<0.000000e+00> : vector<8x128xf32>
    %4 = tpu.matmul %3, %1, %cst {dimension_numbers = #tpu.dot_dimension_numbers<[1], [0], [0], [1], [0, 0, 1, 1], [], []>} : vector<8x32xbf16>, vector<32x128xbf16>, vector<8x128xf32> -> vector<8x128xf32>
    %5 = vector.broadcast %2 : vector<1x128xf32> to vector<8x128xf32>
    %6 = arith.addf %4, %5 : vector<8x128xf32>
    %cst_5 = arith.constant 0.000000e+00 : f32
    %7 = vector.broadcast %cst_5 : f32 to vector<8x128xf32>
    %8 = arith.maximumf %6, %7 : vector<8x128xf32>
    %c0_6 = arith.constant 0 : index
    %c0_7 = arith.constant 0 : index
    %9 = vector.load %arg4[%c0_6, %c0_7] : memref<128x128xbf16, #tpu.memory_space<vmem>>, vector<128x128xbf16>
    %c0_8 = arith.constant 0 : index
    %c0_9 = arith.constant 0 : index
    %10 = vector.load %arg5[%c0_8, %c0_9] : memref<1x128xf32, #tpu.memory_space<vmem>>, vector<1x128xf32>
    %11 = arith.truncf %8 : vector<8x128xf32> to vector<8x128xbf16>
    %cst_10 = arith.constant dense<0.000000e+00> : vector<8x128xf32>
    %12 = tpu.matmul %11, %9, %cst_10 {dimension_numbers = #tpu.dot_dimension_numbers<[1], [0], [0], [1], [0, 0, 1, 1], [], []>} : vector<8x128xbf16>, vector<128x128xbf16>, vector<8x128xf32> -> vector<8x128xf32>
    %13 = vector.broadcast %10 : vector<1x128xf32> to vector<8x128xf32>
    %14 = arith.addf %12, %13 : vector<8x128xf32>
    %cst_11 = arith.constant 0.000000e+00 : f32
    %15 = vector.broadcast %cst_11 : f32 to vector<8x128xf32>
    %16 = arith.maximumf %14, %15 : vector<8x128xf32>
    %c0_12 = arith.constant 0 : index
    %c0_13 = arith.constant 0 : index
    %17 = vector.load %arg6[%c0_12, %c0_13] : memref<128x128xbf16, #tpu.memory_space<vmem>>, vector<128x128xbf16>
    %c0_14 = arith.constant 0 : index
    %c0_15 = arith.constant 0 : index
    %18 = vector.load %arg7[%c0_14, %c0_15] : memref<1x128xf32, #tpu.memory_space<vmem>>, vector<1x128xf32>
    %19 = arith.truncf %16 : vector<8x128xf32> to vector<8x128xbf16>
    %cst_16 = arith.constant dense<0.000000e+00> : vector<8x128xf32>
    %20 = tpu.matmul %19, %17, %cst_16 {dimension_numbers = #tpu.dot_dimension_numbers<[1], [0], [0], [1], [0, 0, 1, 1], [], []>} : vector<8x128xbf16>, vector<128x128xbf16>, vector<8x128xf32> -> vector<8x128xf32>
    %21 = vector.broadcast %18 : vector<1x128xf32> to vector<8x128xf32>
    %22 = arith.addf %20, %21 : vector<8x128xf32>
    %23 = tpu.iota {dimensions = array<i32: 1>} : vector<8x128xi32>
    %c16_i32 = arith.constant 16 : i32
    %24 = vector.broadcast %c16_i32 : i32 to vector<8x128xi32>
    %25 = arith.cmpi slt, %23, %24 : vector<8x128xi32>
    %cst_17 = arith.constant -1.000000e+30 : f32
    %26 = vector.broadcast %cst_17 : f32 to vector<8x128xf32>
    %27 = arith.select %25, %22, %26 : vector<8x128xi1>, vector<8x128xf32>
    %cst_18 = arith.constant dense<0xFF800000> : vector<8xf32>
    %28 = vector.multi_reduction <maximumf>, %27, %cst_18 [1] : vector<8x128xf32> to vector<8xf32>
    %29 = vector.shape_cast %28 : vector<8xf32> to vector<8x1xf32>
    %30 = vector.broadcast %29 : vector<8x1xf32> to vector<8x128xf32>
    %31 = arith.subf %27, %30 : vector<8x128xf32>
    %32 = math.exp %31 : vector<8x128xf32>
    %cst_19 = arith.constant dense<0.000000e+00> : vector<8xf32>
    %33 = vector.multi_reduction <add>, %32, %cst_19 [1] : vector<8x128xf32> to vector<8xf32>
    %34 = vector.shape_cast %33 : vector<8xf32> to vector<8x1xf32>
    %35 = math.log %34 : vector<8x1xf32>
    %36 = vector.broadcast %35 : vector<8x1xf32> to vector<8x128xf32>
    %37 = arith.subf %31, %36 : vector<8x128xf32>
    %c0_20 = arith.constant 0 : index
    %c0_21 = arith.constant 0 : index
    %38 = vector.load %arg8[%c0_20, %c0_21] : memref<8x128xf32, #tpu.memory_space<vmem>>, vector<8x128xf32>
    tpu.vector_store %arg8[%c0_20, %c0_21], %37 {strides = array<i32>} : memref<8x128xf32, #tpu.memory_space<vmem>>, vector<8x128xf32>,
    return
  }
  func.func @transform_0(%arg0: i32) -> (i32, i32) {
    %c0_i32 = arith.constant 0 : i32
    %c0_i32_0 = arith.constant 0 : i32
    return %arg0, %c0_i32 : i32, i32
  }
  func.func @transform_1(%arg0: i32) -> (i32, i32) {
    %c0_i32 = arith.constant 0 : i32
    %c0_i32_0 = arith.constant 0 : i32
    %c0_i32_1 = arith.constant 0 : i32
    return %c0_i32, %c0_i32_0 : i32, i32
  }
  func.func @transform_2(%arg0: i32) -> (i32, i32) {
    %c0_i32 = arith.constant 0 : i32
    %c0_i32_0 = arith.constant 0 : i32
    %c0_i32_1 = arith.constant 0 : i32
    return %c0_i32, %c0_i32_0 : i32, i32
  }
  func.func @transform_3(%arg0: i32) -> (i32, i32) {
    %c0_i32 = arith.constant 0 : i32
    %c0_i32_0 = arith.constant 0 : i32
    %c0_i32_1 = arith.constant 0 : i32
    return %c0_i32, %c0_i32_0 : i32, i32
  }
  func.func @transform_4(%arg0: i32) -> (i32, i32) {
    %c0_i32 = arith.constant 0 : i32
    %c0_i32_0 = arith.constant 0 : i32
    %c0_i32_1 = arith.constant 0 : i32
    return %c0_i32, %c0_i32_0 : i32, i32
  }
  func.func @transform_5(%arg0: i32) -> (i32, i32) {
    %c0_i32 = arith.constant 0 : i32
    %c0_i32_0 = arith.constant 0 : i32
    %c0_i32_1 = arith.constant 0 : i32
    return %c0_i32, %c0_i32_0 : i32, i32
  }
  func.func @transform_6(%arg0: i32) -> (i32, i32) {
    %c0_i32 = arith.constant 0 : i32
    %c0_i32_0 = arith.constant 0 : i32
    %c0_i32_1 = arith.constant 0 : i32
    return %c0_i32, %c0_i32_0 : i32, i32
  }
  func.func @transform_7(%arg0: i32) -> (i32, i32) {
    %c0_i32 = arith.constant 0 : i32
    %c0_i32_0 = arith.constant 0 : i32
    return %arg0, %c0_i32 : i32, i32
  }
}

module attributes {stable_mosaic.version = 11 : i64} {
  func.func @kernel(%arg0: i32, %arg1: memref<8x32xf32, #tpu.memory_space<vmem>>, %arg2: memref<32x128xbf16, #tpu.memory_space<vmem>>, %arg3: memref<1x128xf32, #tpu.memory_space<vmem>>, %arg4: memref<128x128xbf16, #tpu.memory_space<vmem>>, %arg5: memref<1x128xf32, #tpu.memory_space<vmem>>, %arg6: memref<128x128xbf16, #tpu.memory_space<vmem>>, %arg7: memref<1x128xf32, #tpu.memory_space<vmem>>, %arg8: memref<8x128xf32, #tpu.memory_space<vmem>>) attributes {dimension_semantics = [#tpu.dimension_semantics<parallel>], iteration_bounds = array<i64: 1>, scalar_prefetch = 0 : i64, scratch_operands = 0 : i64, tpu.core_type = #tpu.core_type<tc>, window_params = [{transform_indices = @transform_0, window_bounds = array<i64: 8, 32>}, {pipeline_mode = #tpu.pipeline_mode<synchronous>, transform_indices = @transform_1, window_bounds = array<i64: 32, 128>}, {pipeline_mode = #tpu.pipeline_mode<synchronous>, transform_indices = @transform_2, window_bounds = array<i64: 1, 128>}, {pipeline_mode = #tpu.pipeline_mode<synchronous>, transform_indices = @transform_3, window_bounds = array<i64: 128, 128>}, {pipeline_mode = #tpu.pipeline_mode<synchronous>, transform_indices = @transform_4, window_bounds = array<i64: 1, 128>}, {pipeline_mode = #tpu.pipeline_mode<synchronous>, transform_indices = @transform_5, window_bounds = array<i64: 128, 128>}, {pipeline_mode = #tpu.pipeline_mode<synchronous>, transform_indices = @transform_6, window_bounds = array<i64: 1, 128>}, {transform_indices = @transform_7, window_bounds = array<i64: 8, 128>}]} {
    %c0 = arith.constant 0 : index
    %c0_0 = arith.constant 0 : index
    %0 = vector.load %arg1[%c0, %c0_0] : memref<8x32xf32, #tpu.memory_space<vmem>>, vector<8x32xf32>
    %c0_1 = arith.constant 0 : index
    %c0_2 = arith.constant 0 : index
    %1 = vector.load %arg2[%c0_1, %c0_2] : memref<32x128xbf16, #tpu.memory_space<vmem>>, vector<32x128xbf16>
    %c0_3 = arith.constant 0 : index
    %c0_4 = arith.constant 0 : index
    %2 = vector.load %arg3[%c0_3, %c0_4] : memref<1x128xf32, #tpu.memory_space<vmem>>, vector<1x128xf32>
    %3 = arith.truncf %0 : vector<8x32xf32> to vector<8x32xbf16>
    %cst = arith.constant dense<0.000000e+00> : vector<8x128xf32>
    %4 = tpu.matmul %3, %1, %cst {dimension_numbers = #tpu.dot_dimension_numbers<[1], [0], [0], [1], [0, 0, 1, 1], [], []>} : vector<8x32xbf16>, vector<32x128xbf16>, vector<8x128xf32> -> vector<8x128xf32>
    %5 = vector.broadcast %2 : vector<1x128xf32> to vector<8x128xf32>
    %6 = arith.addf %4, %5 : vector<8x128xf32>
    %cst_5 = arith.constant 0.000000e+00 : f32
    %7 = vector.broadcast %cst_5 : f32 to vector<8x128xf32>
    %8 = arith.maximumf %6, %7 : vector<8x128xf32>
    %c0_6 = arith.constant 0 : index
    %c0_7 = arith.constant 0 : index
    %9 = vector.load %arg4[%c0_6, %c0_7] : memref<128x128xbf16, #tpu.memory_space<vmem>>, vector<128x128xbf16>
    %c0_8 = arith.constant 0 : index
    %c0_9 = arith.constant 0 : index
    %10 = vector.load %arg5[%c0_8, %c0_9] : memref<1x128xf32, #tpu.memory_space<vmem>>, vector<1x128xf32>
    %11 = arith.truncf %8 : vector<8x128xf32> to vector<8x128xbf16>
    %cst_10 = arith.constant dense<0.000000e+00> : vector<8x128xf32>
    %12 = tpu.matmul %11, %9, %cst_10 {dimension_numbers = #tpu.dot_dimension_numbers<[1], [0], [0], [1], [0, 0, 1, 1], [], []>} : vector<8x128xbf16>, vector<128x128xbf16>, vector<8x128xf32> -> vector<8x128xf32>
    %13 = vector.broadcast %10 : vector<1x128xf32> to vector<8x128xf32>
    %14 = arith.addf %12, %13 : vector<8x128xf32>
    %cst_11 = arith.constant 0.000000e+00 : f32
    %15 = vector.broadcast %cst_11 : f32 to vector<8x128xf32>
    %16 = arith.maximumf %14, %15 : vector<8x128xf32>
    %c0_12 = arith.constant 0 : index
    %c0_13 = arith.constant 0 : index
    %17 = vector.load %arg6[%c0_12, %c0_13] : memref<128x128xbf16, #tpu.memory_space<vmem>>, vector<128x128xbf16>
    %c0_14 = arith.constant 0 : index
    %c0_15 = arith.constant 0 : index
    %18 = vector.load %arg7[%c0_14, %c0_15] : memref<1x128xf32, #tpu.memory_space<vmem>>, vector<1x128xf32>
    %19 = arith.truncf %16 : vector<8x128xf32> to vector<8x128xbf16>
    %cst_16 = arith.constant dense<0.000000e+00> : vector<8x128xf32>
    %20 = tpu.matmul %19, %17, %cst_16 {dimension_numbers = #tpu.dot_dimension_numbers<[1], [0], [0], [1], [0, 0, 1, 1], [], []>} : vector<8x128xbf16>, vector<128x128xbf16>, vector<8x128xf32> -> vector<8x128xf32>
    %21 = vector.broadcast %18 : vector<1x128xf32> to vector<8x128xf32>
    %22 = arith.addf %20, %21 : vector<8x128xf32>
    %23 = tpu.iota {dimensions = array<i32: 1>} : vector<8x128xi32>
    %c16_i32 = arith.constant 16 : i32
    %24 = vector.broadcast %c16_i32 : i32 to vector<8x128xi32>
    %25 = arith.cmpi slt, %23, %24 : vector<8x128xi32>
    %cst_17 = arith.constant -1.000000e+30 : f32
    %26 = vector.broadcast %cst_17 : f32 to vector<8x128xf32>
    %27 = arith.select %25, %22, %26 : vector<8x128xi1>, vector<8x128xf32>
    %cst_18 = arith.constant dense<0xFF800000> : vector<8xf32>
    %28 = vector.multi_reduction <maximumf>, %27, %cst_18 [1] : vector<8x128xf32> to vector<8xf32>
    %29 = vector.shape_cast %28 : vector<8xf32> to vector<8x1xf32>
    %30 = vector.broadcast %29 : vector<8x1xf32> to vector<8x128xf32>
    %31 = arith.subf %27, %30 : vector<8x128xf32>
    %32 = math.exp %31 : vector<8x128xf32>
    %cst_19 = arith.constant dense<0.000000e+00> : vector<8xf32>
    %33 = vector.multi_reduction <add>, %32, %cst_19 [1] : vector<8x128xf32> to vector<8xf32>
    %34 = vector.shape_cast %33 : vector<8xf32> to vector<8x1xf32>
    %35 = math.log %34 : vector<8x1xf32>
    %36 = vector.broadcast %35 : vector<8x1xf32> to vector<8x128xf32>
    %37 = arith.subf %31, %36 : vector<8x128xf32>
    %c0_20 = arith.constant 0 : index
    %c0_21 = arith.constant 0 : index
    %38 = vector.load %arg8[%c0_20, %c0_21] : memref<8x128xf32, #tpu.memory_space<vmem>>, vector<8x128xf32>
    tpu.vector_store %arg8[%c0_20, %c0_21], %37 {strides = array<i32>} : memref<8x128xf32, #tpu.memory_space<vmem>>, vector<8x128xf32>,
    return
  }
  func.func @transform_0(%arg0: i32) -> (i32, i32) {
    %c0_i32 = arith.constant 0 : i32
    %c0_i32_0 = arith.constant 0 : i32
    return %arg0, %c0_i32 : i32, i32
  }
  func.func @transform_1(%arg0: i32) -> (i32, i32) {
    %c0_i32 = arith.constant 0 : i32
    %c0_i32_0 = arith.constant 0 : i32
    %c0_i32_1 = arith.constant 0 : i32
    return %c0_i32, %c0_i32_0 : i32, i32
  }
  func.func @transform_2(%arg0: i32) -> (i32, i32) {
    %c0_i32 = arith.constant 0 : i32
    %c0_i32_0 = arith.constant 0 : i32
    %c0_i32_1 = arith.constant 0 : i32
    return %c0_i32, %c0_i32_0 : i32, i32
  }
  func.func @transform_3(%arg0: i32) -> (i32, i32) {
    %c0_i32 = arith.constant 0 : i32
    %c0_i32_0 = arith.constant 0 : i32
    %c0_i32_1 = arith.constant 0 : i32
    return %c0_i32, %c0_i32_0 : i32, i32
  }
  func.func @transform_4(%arg0: i32) -> (i32, i32) {
    %c0_i32 = arith.constant 0 : i32
    %c0_i32_0 = arith.constant 0 : i32
    %c0_i32_1 = arith.constant 0 : i32
    return %c0_i32, %c0_i32_0 : i32, i32
  }
  func.func @transform_5(%arg0: i32) -> (i32, i32) {
    %c0_i32 = arith.constant 0 : i32
    %c0_i32_0 = arith.constant 0 : i32
    %c0_i32_1 = arith.constant 0 : i32
    return %c0_i32, %c0_i32_0 : i32, i32
  }
  func.func @transform_6(%arg0: i32) -> (i32, i32) {
    %c0_i32 = arith.constant 0 : i32
    %c0_i32_0 = arith.constant 0 : i32
    %c0_i32_1 = arith.constant 0 : i32
    return %c0_i32, %c0_i32_0 : i32, i32
  }
  func.func @transform_7(%arg0: i32) -> (i32, i32) {
    %c0_i32 = arith.constant 0 : i32
    %c0_i32_0 = arith.constant 0 : i32
    return %arg0, %c0_i32 : i32, i32
  }
}

</mosaic_0001>

<llo_original>
// kernel: forward.1
$region0: #{forward.1}
  #allocation0 [shape = 'u32[]', space=smem, size = 0x4, offset = 0x4, fixed_abs, tag = 'smem constant byte address 0x4 - core index']
  #allocation1 [shape = 'u32[144,128]{1,0:T(1,128)}', space=vmem, size = 0x12000, scoped, tag = 'internal scratch']
  %s0 = inlined_call_operand.hbm [shape: f32[8,32], index: 0, kind: input, shape index: {}]
  %s1 = inlined_call_operand.hbm [shape: bf16[32,128], index: 1, kind: input, shape index: {}]
  %s2 = inlined_call_operand.vmem [shape: f32[1,128], index: 2, kind: input, shape index: {}]
  %s3 = inlined_call_operand.hbm [shape: bf16[128,128], index: 3, kind: input, shape index: {}]
  %s4 = inlined_call_operand.vmem [shape: f32[1,128], index: 4, kind: input, shape index: {}]
  %s5 = inlined_call_operand.hbm [shape: bf16[128,128], index: 5, kind: input, shape index: {}]
  %s6 = inlined_call_operand.vmem [shape: f32[1,128], index: 6, kind: input, shape index: {}]
  %s7 = inlined_call_operand.hbm [shape: f32[8,128], index: 7, kind: output, shape index: {}]
  %s8 = sld [smem:[#allocation0]]
  $region54: #{forward.1} parent=0
    _
  %s10 = ssub.s32 1, %s8
  %s11 = scalar_select 0, %s10, %s8
  $region1: #{forward.1} parent=0
    #allocation2 [shape = 'u8[4096]{0}', space=vmem, size = 0x1000, scoped, tag = 'input window, operand 0, single buffered']
    #allocation3 [shape = 's32[1]{0}', space=sflag, size = 0x4, scoped, tag = 'scoped memory for forward.1']
    #allocation4 [shape = 's32[1]{0}', space=sflag, size = 0x4, scoped, tag = 'scoped memory for forward.1']
    #allocation5 [shape = 'u8[8192]{0}', space=vmem, size = 0x2000, scoped, tag = 'input window, operand 1, single buffered']
    #allocation6 [shape = 's32[1]{0}', space=sflag, size = 0x4, scoped, tag = 'scoped memory for forward.1']
    #allocation7 [shape = 'u8[32768]{0}', space=vmem, size = 0x8000, scoped, tag = 'input window, operand 3, single buffered']
    #allocation8 [shape = 'u8[32768]{0}', space=vmem, size = 0x8000, scoped, tag = 'input window, operand 5, single buffered']
    #allocation9 [shape = 's32[1]{0}', space=sflag, size = 0x4, scoped, tag = 'scoped memory for forward.1']
    #allocation10 [shape = 'u8[4096]{0}', space=vmem, size = 0x1000, scoped, tag = 'output window, operand 0, single buffered']
    %12 = vsyncpa [#allocation3], 0
    %13 = vsyncpa [#allocation6], 0
    %14 = vsyncpa [#allocation9], 0
    %15 = vsyncpa [#allocation4], 0
    // Predicated region
    $region2: #{forward.1} parent=1 // pred_check
      _
    $region3: #{forward.1} parent=1 // pred_check_branch
      %17 = sbr.rel (0) target = $region5
    $region4: #{forward.1} parent=1 // pred_region
      %s19 = ssub.s32 128, 128
      %20 = vsyncadd [#allocation3], %s19
      %s22 = sshll.u32 [#allocation2], 4
      %s23 = int_to_ptr.vmem [resolvable:$true] %s22
      %25 = dma.hbm_to_vmem [thread:$0]  %s0, 128, %s23, [#allocation3]
    $region5: #{forward.1} parent=1 // pred_fallthru
      _
    // Predicated region
    $region6: #{forward.1} parent=1 // pred_check
      _
    $region7: #{forward.1} parent=1 // pred_check_branch
      %27 = sbr.rel (0) target = $region9
    $region8: #{forward.1} parent=1 // pred_region
      %s29 = ssub.s32 256, 256
      %30 = vsyncadd [#allocation6], %s29
      %s31 = sshll.u32 [#allocation5], 4
      %s32 = int_to_ptr.vmem [resolvable:$true] %s31
      %37 = dma.hbm_to_vmem [thread:$0]  %s1, 256, %s32, [#allocation6], 64, 64, 4
    $region9: #{forward.1} parent=1 // pred_fallthru
      _
    // Predicated region
    $region10: #{forward.1} parent=1 // pred_check
      _
    $region11: #{forward.1} parent=1 // pred_check_branch
      %39 = sbr.rel (0) target = $region13
    $region12: #{forward.1} parent=1 // pred_region
      _
    $region13: #{forward.1} parent=1 // pred_fallthru
      _
    // Predicated region
    $region14: #{forward.1} parent=1 // pred_check
      _
    $region15: #{forward.1} parent=1 // pred_check_branch
      %41 = sbr.rel (0) target = $region17
    $region16: #{forward.1} parent=1 // pred_region
      %s43 = ssub.s32 1024, 1024
      %44 = vsyncadd [#allocation6], %s43
      %s45 = sshll.u32 [#allocation7], 4
      %s46 = int_to_ptr.vmem [resolvable:$true] %s45
      %51 = dma.hbm_to_vmem [thread:$0]  %s3, 1024, %s46, [#allocation6], 64, 64, 4
    $region17: #{forward.1} parent=1 // pred_fallthru
      _
    // Predicated region
    $region18: #{forward.1} parent=1 // pred_check
      _
    $region19: #{forward.1} parent=1 // pred_check_branch
      %53 = sbr.rel (0) target = $region21
    $region20: #{forward.1} parent=1 // pred_region
      _
    $region21: #{forward.1} parent=1 // pred_fallthru
      _
    // Predicated region
    $region22: #{forward.1} parent=1 // pred_check
      _
    $region23: #{forward.1} parent=1 // pred_check_branch
      %55 = sbr.rel (0) target = $region25
    $region24: #{forward.1} parent=1 // pred_region
      %s57 = ssub.s32 1024, 1024
      %58 = vsyncadd [#allocation9], %s57
      %s59 = sshll.u32 [#allocation8], 4
      %s60 = int_to_ptr.vmem [resolvable:$true] %s59
      %65 = dma.hbm_to_vmem [thread:$0]  %s5, 1024, %s60, [#allocation9], 64, 64, 4
    $region25: #{forward.1} parent=1 // pred_fallthru
      _
    // Predicated region
    $region26: #{forward.1} parent=1 // pred_check
      _
    $region27: #{forward.1} parent=1 // pred_check_branch
      %67 = sbr.rel (0) target = $region29
    $region28: #{forward.1} parent=1 // pred_region
      _
    $region29: #{forward.1} parent=1 // pred_fallthru
      _
    // Predicated region
    $region30: #{forward.1} parent=1 // pred_check
      _
    $region31: #{forward.1} parent=1 // pred_check_branch
      %69 = sbr.rel (0) target = $region33
    $region32: #{forward.1} parent=1 // pred_region
      %70 = dma.done [#allocation3], 128
    $region33: #{forward.1} parent=1 // pred_fallthru
      _
    // Predicated region
    $region34: #{forward.1} parent=1 // pred_check
      _
    $region35: #{forward.1} parent=1 // pred_check_branch
      %72 = sbr.rel (0) target = $region37
    $region36: #{forward.1} parent=1 // pred_region
      %73 = dma.done [#allocation6], 256
    $region37: #{forward.1} parent=1 // pred_fallthru
      _
    // Predicated region
    $region38: #{forward.1} parent=1 // pred_check
      _
    $region39: #{forward.1} parent=1 // pred_check_branch
      %75 = sbr.rel (0) target = $region41
    $region40: #{forward.1} parent=1 // pred_region
      %76 = dma.done [#allocation6], 1024
    $region41: #{forward.1} parent=1 // pred_fallthru
      _
    // Predicated region
    $region42: #{forward.1} parent=1 // pred_check
      _
    $region43: #{forward.1} parent=1 // pred_check_branch
      %78 = sbr.rel (0) target = $region45
    $region44: #{forward.1} parent=1 // pred_region
      %79 = dma.done [#allocation9], 1024
    $region45: #{forward.1} parent=1 // pred_fallthru
      _
    %v81 = vld [vmem:[#allocation2] sm:$0xff]
    %v82 = vld [vmem:[#allocation5] sm:$0xf]
    %v83 = vld [vmem:[#allocation5 + $0x4] sm:$0xf]
    %v84 = vld [vmem:[#allocation5 + $0x8] sm:$0xf]
    %v85 = vld [vmem:[#allocation5 + $0xc] sm:$0xf]
    %v86 = vld [vmem:[%s2] sm:$0x1]
    %v87 = vpack.c.bf16 %v81, %v81
    %v89 = vlaneseq
    %v90 = vshrl.u32 %v89, 7
    %v91 = vsub.s32 0, %v90
    %v92 = vrot.slane %v86, %v91
    %v98 = vunpack.c.l.b16 %v82
    %v99 = vunpack.c.l.b16 %v83
    %v100 = vunpack.c.l.b16 %v84
    %v101 = vunpack.c.l.b16 %v85
    %v102 = vpack.c.b16 %v99, %v98
    %v103 = vpack.c.b16 %v101, %v100
    %vm106 = vcmask 261120
    %v108 = vsel %vm106, %v87, 0
    %110 = vmatprep.subr.bf16.mxu0 0
    %111 = vmatpush1.bf16.msra.mxu0 %v102
    %112 = vmatprep.subr.bf16.mxu0 0
    %113 = vmatpush1.bf16.msra.mxu0 %v103
    %114 = vmatprep.subr.bf16.mxu0 0
    %115 = vmatpush1.bf16.msra.mxu0 0
    %116 = vmatprep.subr.bf16.mxu0 0
    %117 = vmatpush1.bf16.msra.mxu0 0
    %118 = vmatprep.subr.bf16.mxu0 0
    %119 = vmatpush1.bf16.msra.mxu0 0
    %120 = vmatprep.subr.bf16.mxu0 0
    %121 = vmatpush1.bf16.msra.mxu0 0
    %122 = vmatprep.subr.bf16.mxu0 0
    %123 = vmatpush1.bf16.msra.mxu0 0
    %124 = vmatprep.subr.bf16.mxu0 0
    %125 = vmatpush1.bf16.msra.mxu0 0
    %126 = vmatprep.subr.bf16.mxu0 0
    %127 = vmatpush1.bf16.msra.mxu0 0
    %128 = vmatprep.subr.bf16.mxu0 0
    %129 = vmatpush1.bf16.msra.mxu0 0
    %130 = vmatprep.subr.bf16.mxu0 0
    %131 = vmatpush1.bf16.msra.mxu0 0
    %132 = vmatprep.subr.bf16.mxu0 0
    %133 = vmatpush1.bf16.msra.mxu0 0
    %134 = vmatprep.subr.bf16.mxu0 0
    %135 = vmatpush1.bf16.msra.mxu0 0
    %136 = vmatprep.subr.bf16.mxu0 0
    %137 = vmatpush1.bf16.msra.mxu0 0
    %138 = vmatprep.subr.bf16.mxu0 0
    %139 = vmatpush1.bf16.msra.mxu0 0
    %140 = vmatprep.subr.bf16.mxu0 0
    %141 = vmatpush1.bf16.msra.mxu0 0
    %142 = vmatprep.mubr.bf16.mxu0 0
    %143 = vmatmul.mubr.bf16.gmra.mrb[0].mxu0 %v108
    %v144 = vpop.f32.mrb[0].mxu0
    %v145 = vadd.f32 %v92, %v144
    %v146 = vpop.f32.mrb[0].mxu0
    %v147 = vpop.f32.mrb[0].mxu0
    %v148 = vpop.f32.mrb[0].mxu0
    %149 = vdwg.mxu0
    %v150 = vmax.f32 %v145, 0.0
    %v151 = vld [vmem:[#allocation7] sm:$0xf]
    %v152 = vld [vmem:[#allocation7 + $0x4] sm:$0xf]
    %v153 = vld [vmem:[#allocation7 + $0x8] sm:$0xf]
    %v154 = vld [vmem:[#allocation7 + $0xc] sm:$0xf]
    %v155 = vld [vmem:[#allocation7 + $0x10] sm:$0xf]
    %v156 = vld [vmem:[#allocation7 + $0x14] sm:$0xf]
    %v157 = vld [vmem:[#allocation7 + $0x18] sm:$0xf]
    %v158 = vld [vmem:[#allocation7 + $0x1c] sm:$0xf]
    %v159 = vld [vmem:[#allocation7 + $0x20] sm:$0xf]
    %v160 = vld [vmem:[#allocation7 + $0x24] sm:$0xf]
    %v161 = vld [vmem:[#allocation7 + $0x28] sm:$0xf]
    %v162 = vld [vmem:[#allocation7 + $0x2c] sm:$0xf]
    %v163 = vld [vmem:[#allocation7 + $0x30] sm:$0xf]
    %v164 = vld [vmem:[#allocation7 + $0x34] sm:$0xf]
    %v165 = vld [vmem:[#allocation7 + $0x38] sm:$0xf]
    %v166 = vld [vmem:[#allocation7 + $0x3c] sm:$0xf]
    %v167 = vld [vmem:[%s4] sm:$0x1]
    %v168 = vpack.c.bf16 %v150, %v150
    %v170 = vlaneseq
    %v171 = vshrl.u32 %v170, 7
    %v172 = vsub.s32 0, %v171
    %v173 = vrot.slane %v167, %v172
    %v191 = vunpack.c.l.b16 %v151
    %v192 = vunpack.c.l.b16 %v152
    %v193 = vunpack.c.l.b16 %v153
    %v194 = vunpack.c.l.b16 %v154
    %v195 = vunpack.c.l.b16 %v155
    %v196 = vunpack.c.l.b16 %v156
    %v197 = vunpack.c.l.b16 %v157
    %v198 = vunpack.c.l.b16 %v158
    %v199 = vunpack.c.l.b16 %v159
    %v200 = vunpack.c.l.b16 %v160
    %v201 = vunpack.c.l.b16 %v161
    %v202 = vunpack.c.l.b16 %v162
    %v203 = vunpack.c.l.b16 %v163
    %v204 = vunpack.c.l.b16 %v164
    %v205 = vunpack.c.l.b16 %v165
    %v206 = vunpack.c.l.b16 %v166
    %v207 = vpack.c.b16 %v192, %v191
    %v208 = vpack.c.b16 %v194, %v193
    %v209 = vpack.c.b16 %v196, %v195
    %v210 = vpack.c.b16 %v198, %v197
    %v211 = vpack.c.b16 %v200, %v199
    %v212 = vpack.c.b16 %v202, %v201
    %v213 = vpack.c.b16 %v204, %v203
    %v214 = vpack.c.b16 %v206, %v205
    %223 = vmatprep.subr.bf16.mxu0 0
    %224 = vmatpush1.bf16.msra.mxu0 %v207
    %225 = vmatprep.subr.bf16.mxu0 0
    %226 = vmatpush1.bf16.msra.mxu0 %v208
    %227 = vmatprep.subr.bf16.mxu0 0
    %228 = vmatpush1.bf16.msra.mxu0 %v209
    %229 = vmatprep.subr.bf16.mxu0 0
    %230 = vmatpush1.bf16.msra.mxu0 %v210
    %231 = vmatprep.subr.bf16.mxu0 0
    %232 = vmatpush1.bf16.msra.mxu0 %v211
    %233 = vmatprep.subr.bf16.mxu0 0
    %234 = vmatpush1.bf16.msra.mxu0 %v212
    %235 = vmatprep.subr.bf16.mxu0 0
    %236 = vmatpush1.bf16.msra.mxu0 %v213
    %237 = vmatprep.subr.bf16.mxu0 0
    %238 = vmatpush1.bf16.msra.mxu0 %v214
    %239 = vmatprep.subr.bf16.mxu0 0
    %240 = vmatpush1.bf16.msra.mxu0 0
    %241 = vmatprep.subr.bf16.mxu0 0
    %242 = vmatpush1.bf16.msra.mxu0 0
    %243 = vmatprep.subr.bf16.mxu0 0
    %244 = vmatpush1.bf16.msra.mxu0 0
    %245 = vmatprep.subr.bf16.mxu0 0
    %246 = vmatpush1.bf16.msra.mxu0 0
    %247 = vmatprep.subr.bf16.mxu0 0
    %248 = vmatpush1.bf16.msra.mxu0 0
    %249 = vmatprep.subr.bf16.mxu0 0
    %250 = vmatpush1.bf16.msra.mxu0 0
    %251 = vmatprep.subr.bf16.mxu0 0
    %252 = vmatpush1.bf16.msra.mxu0 0
    %253 = vmatprep.subr.bf16.mxu0 0
    %254 = vmatpush1.bf16.msra.mxu0 0
    %255 = vmatprep.mubr.bf16.mxu0 0
    %256 = vmatmul.mubr.bf16.gmra.mrb[0].mxu0 %v168
    %v257 = vpop.f32.mrb[0].mxu0
    %v258 = vadd.f32 %v173, %v257
    %v259 = vpop.f32.mrb[0].mxu0
    %v260 = vpop.f32.mrb[0].mxu0
    %v261 = vpop.f32.mrb[0].mxu0
    %262 = vdwg.mxu0
    %v263 = vmax.f32 %v258, 0.0
    %v264 = vld [vmem:[#allocation8] sm:$0xf]
    %v265 = vld [vmem:[#allocation8 + $0x4] sm:$0xf]
    %v266 = vld [vmem:[#allocation8 + $0x8] sm:$0xf]
    %v267 = vld [vmem:[#allocation8 + $0xc] sm:$0xf]
    %v268 = vld [vmem:[#allocation8 + $0x10] sm:$0xf]
    %v269 = vld [vmem:[#allocation8 + $0x14] sm:$0xf]
    %v270 = vld [vmem:[#allocation8 + $0x18] sm:$0xf]
    %v271 = vld [vmem:[#allocation8 + $0x1c] sm:$0xf]
    %v272 = vld [vmem:[#allocation8 + $0x20] sm:$0xf]
    %v273 = vld [vmem:[#allocation8 + $0x24] sm:$0xf]
    %v274 = vld [vmem:[#allocation8 + $0x28] sm:$0xf]
    %v275 = vld [vmem:[#allocation8 + $0x2c] sm:$0xf]
    %v276 = vld [vmem:[#allocation8 + $0x30] sm:$0xf]
    %v277 = vld [vmem:[#allocation8 + $0x34] sm:$0xf]
    %v278 = vld [vmem:[#allocation8 + $0x38] sm:$0xf]
    %v279 = vld [vmem:[#allocation8 + $0x3c] sm:$0xf]
    %v280 = vld [vmem:[%s6] sm:$0x1]
    %v281 = vpack.c.bf16 %v263, %v263
    %v283 = vlaneseq
    %v284 = vshrl.u32 %v283, 7
    %v285 = vsub.s32 0, %v284
    %v286 = vrot.slane %v280, %v285
    %v304 = vunpack.c.l.b16 %v264
    %v305 = vunpack.c.l.b16 %v265
    %v306 = vunpack.c.l.b16 %v266
    %v307 = vunpack.c.l.b16 %v267
    %v308 = vunpack.c.l.b16 %v268
    %v309 = vunpack.c.l.b16 %v269
    %v310 = vunpack.c.l.b16 %v270
    %v311 = vunpack.c.l.b16 %v271
    %v312 = vunpack.c.l.b16 %v272
    %v313 = vunpack.c.l.b16 %v273
    %v314 = vunpack.c.l.b16 %v274
    %v315 = vunpack.c.l.b16 %v275
    %v316 = vunpack.c.l.b16 %v276
    %v317 = vunpack.c.l.b16 %v277
    %v318 = vunpack.c.l.b16 %v278
    %v319 = vunpack.c.l.b16 %v279
    %v320 = vpack.c.b16 %v305, %v304
    %v321 = vpack.c.b16 %v307, %v306
    %v322 = vpack.c.b16 %v309, %v308
    %v323 = vpack.c.b16 %v311, %v310
    %v324 = vpack.c.b16 %v313, %v312
    %v325 = vpack.c.b16 %v315, %v314
    %v326 = vpack.c.b16 %v317, %v316
    %v327 = vpack.c.b16 %v319, %v318
    %336 = vmatprep.subr.bf16.mxu0 0
    %337 = vmatpush1.bf16.msra.mxu0 %v320
    %338 = vmatprep.subr.bf16.mxu0 0
    %339 = vmatpush1.bf16.msra.mxu0 %v321
    %340 = vmatprep.subr.bf16.mxu0 0
    %341 = vmatpush1.bf16.msra.mxu0 %v322
    %342 = vmatprep.subr.bf16.mxu0 0
    %343 = vmatpush1.bf16.msra.mxu0 %v323
    %344 = vmatprep.subr.bf16.mxu0 0
    %345 = vmatpush1.bf16.msra.mxu0 %v324
    %346 = vmatprep.subr.bf16.mxu0 0
    %347 = vmatpush1.bf16.msra.mxu0 %v325
    %348 = vmatprep.subr.bf16.mxu0 0
    %349 = vmatpush1.bf16.msra.mxu0 %v326
    %350 = vmatprep.subr.bf16.mxu0 0
    %351 = vmatpush1.bf16.msra.mxu0 %v327
    %352 = vmatprep.subr.bf16.mxu0 0
    %353 = vmatpush1.bf16.msra.mxu0 0
    %354 = vmatprep.subr.bf16.mxu0 0
    %355 = vmatpush1.bf16.msra.mxu0 0
    %356 = vmatprep.subr.bf16.mxu0 0
    %357 = vmatpush1.bf16.msra.mxu0 0
    %358 = vmatprep.subr.bf16.mxu0 0
    %359 = vmatpush1.bf16.msra.mxu0 0
    %360 = vmatprep.subr.bf16.mxu0 0
    %361 = vmatpush1.bf16.msra.mxu0 0
    %362 = vmatprep.subr.bf16.mxu0 0
    %363 = vmatpush1.bf16.msra.mxu0 0
    %364 = vmatprep.subr.bf16.mxu0 0
    %365 = vmatpush1.bf16.msra.mxu0 0
    %366 = vmatprep.subr.bf16.mxu0 0
    %367 = vmatpush1.bf16.msra.mxu0 0
    %368 = vmatprep.mubr.bf16.mxu0 0
    %369 = vmatmul.mubr.bf16.gmra.mrb[0].mxu0 %v281
    %v370 = vpop.f32.mrb[0].mxu0
    %v371 = vadd.f32 %v286, %v370
    %v372 = vpop.f32.mrb[0].mxu0
    %v373 = vpop.f32.mrb[0].mxu0
    %v374 = vpop.f32.mrb[0].mxu0
    %375 = vdwg.mxu0
    %v376 = vlaneseq
    %v377 = vand.u32 %v376, 127
    %vm378 = vcmp.lt.s32.totalorder %v377, 16
    %v379 = vsel %vm378, %v371, -1e+30
    %380 = vmax.xlane.f32.xlu0 %v379
    %v381 = vpop.xlane.xlu0 %380
    %v382 = vsub.f32 %v379, %v381
    %v383 = vmul.f32 %v382, 1.442695
    %v384 = vpow.pop %v383
    %385 = vadd.xlane.f32.xlu0 %v384
    %v386 = vpop.xlane.xlu0 %385
    %v387 = vlog2.pop %v386
    %v388 = vmul.f32 %v387, 0.6931472
    %v389 = vsub.f32 %v382, %v388
    %390 = vst [vmem:[#allocation10] sm:$0xff] %v389
    // Predicated region
    $region46: #{forward.1} parent=1 // pred_check
      _
    $region47: #{forward.1} parent=1 // pred_check_branch
      %392 = sbr.rel (0) target = $region49
    $region48: #{forward.1} parent=1 // pred_region
      %s394 = ssub.s32 128, 128
      %395 = vsyncadd [#allocation4], %s394
      %s397 = sshll.u32 [#allocation10], 4
      %s398 = int_to_ptr.vmem [resolvable:$true] %s397
      %400 = dma.vmem_to_hbm [thread:$0]  %s398, 128, %s7, [#allocation4]
    $region49: #{forward.1} parent=1 // pred_fallthru
      _
    // Predicated region
    $region50: #{forward.1} parent=1 // pred_check
      _
    $region51: #{forward.1} parent=1 // pred_check_branch
      %402 = sbr.rel (0) target = $region53
    $region52: #{forward.1} parent=1 // pred_region
      %403 = dma.done [#allocation4], 128
    $region53: #{forward.1} parent=1 // pred_fallthru
      _
    %404 = vsyncpa [#allocation3], 1
    %405 = vsyncpa [#allocation6], 1
    %406 = vsyncpa [#allocation9], 1
    %407 = vsyncpa [#allocation4], 1

// kernel: forward.1
$region0: #{forward.1}
  #allocation0 [shape = 'u32[]', space=smem, size = 0x4, offset = 0x4, fixed_abs, tag = 'smem constant byte address 0x4 - core index']
  #allocation1 [shape = 'u32[144,128]{1,0:T(1,128)}', space=vmem, size = 0x12000, scoped, tag = 'internal scratch']
  %s0 = inlined_call_operand.hbm [shape: f32[8,32], index: 0, kind: input, shape index: {}]
  %s1 = inlined_call_operand.hbm [shape: bf16[32,128], index: 1, kind: input, shape index: {}]
  %s2 = inlined_call_operand.vmem [shape: f32[1,128], index: 2, kind: input, shape index: {}]
  %s3 = inlined_call_operand.hbm [shape: bf16[128,128], index: 3, kind: input, shape index: {}]
  %s4 = inlined_call_operand.vmem [shape: f32[1,128], index: 4, kind: input, shape index: {}]
  %s5 = inlined_call_operand.hbm [shape: bf16[128,128], index: 5, kind: input, shape index: {}]
  %s6 = inlined_call_operand.vmem [shape: f32[1,128], index: 6, kind: input, shape index: {}]
  %s7 = inlined_call_operand.hbm [shape: f32[8,128], index: 7, kind: output, shape index: {}]
  %s8 = sld [smem:[#allocation0]]
  $region54: #{forward.1} parent=0
    _
  %s10 = ssub.s32 1, %s8
  %s11 = scalar_select 0, %s10, %s8
  $region1: #{forward.1} parent=0
    #allocation2 [shape = 'u8[4096]{0}', space=vmem, size = 0x1000, scoped, tag = 'input window, operand 0, single buffered']
    #allocation3 [shape = 's32[1]{0}', space=sflag, size = 0x4, scoped, tag = 'scoped memory for forward.1']
    #allocation4 [shape = 's32[1]{0}', space=sflag, size = 0x4, scoped, tag = 'scoped memory for forward.1']
    #allocation5 [shape = 'u8[8192]{0}', space=vmem, size = 0x2000, scoped, tag = 'input window, operand 1, single buffered']
    #allocation6 [shape = 's32[1]{0}', space=sflag, size = 0x4, scoped, tag = 'scoped memory for forward.1']
    #allocation7 [shape = 'u8[32768]{0}', space=vmem, size = 0x8000, scoped, tag = 'input window, operand 3, single buffered']
    #allocation8 [shape = 'u8[32768]{0}', space=vmem, size = 0x8000, scoped, tag = 'input window, operand 5, single buffered']
    #allocation9 [shape = 's32[1]{0}', space=sflag, size = 0x4, scoped, tag = 'scoped memory for forward.1']
    #allocation10 [shape = 'u8[4096]{0}', space=vmem, size = 0x1000, scoped, tag = 'output window, operand 0, single buffered']
    %12 = vsyncpa [#allocation3], 0
    %13 = vsyncpa [#allocation6], 0
    %14 = vsyncpa [#allocation9], 0
    %15 = vsyncpa [#allocation4], 0
    // Predicated region
    $region2: #{forward.1} parent=1 // pred_check
      _
    $region3: #{forward.1} parent=1 // pred_check_branch
      %17 = sbr.rel (0) target = $region5
    $region4: #{forward.1} parent=1 // pred_region
      %s19 = ssub.s32 128, 128
      %20 = vsyncadd [#allocation3], %s19
      %s22 = sshll.u32 [#allocation2], 4
      %s23 = int_to_ptr.vmem [resolvable:$true] %s22
      %25 = dma.hbm_to_vmem [thread:$0]  %s0, 128, %s23, [#allocation3]
    $region5: #{forward.1} parent=1 // pred_fallthru
      _
    // Predicated region
    $region6: #{forward.1} parent=1 // pred_check
      _
    $region7: #{forward.1} parent=1 // pred_check_branch
      %27 = sbr.rel (0) target = $region9
    $region8: #{forward.1} parent=1 // pred_region
      %s29 = ssub.s32 256, 256
      %30 = vsyncadd [#allocation6], %s29
      %s31 = sshll.u32 [#allocation5], 4
      %s32 = int_to_ptr.vmem [resolvable:$true] %s31
      %37 = dma.hbm_to_vmem [thread:$0]  %s1, 256, %s32, [#allocation6], 64, 64, 4
    $region9: #{forward.1} parent=1 // pred_fallthru
      _
    // Predicated region
    $region10: #{forward.1} parent=1 // pred_check
      _
    $region11: #{forward.1} parent=1 // pred_check_branch
      %39 = sbr.rel (0) target = $region13
    $region12: #{forward.1} parent=1 // pred_region
      _
    $region13: #{forward.1} parent=1 // pred_fallthru
      _
    // Predicated region
    $region14: #{forward.1} parent=1 // pred_check
      _
    $region15: #{forward.1} parent=1 // pred_check_branch
      %41 = sbr.rel (0) target = $region17
    $region16: #{forward.1} parent=1 // pred_region
      %s43 = ssub.s32 1024, 1024
      %44 = vsyncadd [#allocation6], %s43
      %s45 = sshll.u32 [#allocation7], 4
      %s46 = int_to_ptr.vmem [resolvable:$true] %s45
      %51 = dma.hbm_to_vmem [thread:$0]  %s3, 1024, %s46, [#allocation6], 64, 64, 4
    $region17: #{forward.1} parent=1 // pred_fallthru
      _
    // Predicated region
    $region18: #{forward.1} parent=1 // pred_check
      _
    $region19: #{forward.1} parent=1 // pred_check_branch
      %53 = sbr.rel (0) target = $region21
    $region20: #{forward.1} parent=1 // pred_region
      _
    $region21: #{forward.1} parent=1 // pred_fallthru
      _
    // Predicated region
    $region22: #{forward.1} parent=1 // pred_check
      _
    $region23: #{forward.1} parent=1 // pred_check_branch
      %55 = sbr.rel (0) target = $region25
    $region24: #{forward.1} parent=1 // pred_region
      %s57 = ssub.s32 1024, 1024
      %58 = vsyncadd [#allocation9], %s57
      %s59 = sshll.u32 [#allocation8], 4
      %s60 = int_to_ptr.vmem [resolvable:$true] %s59
      %65 = dma.hbm_to_vmem [thread:$0]  %s5, 1024, %s60, [#allocation9], 64, 64, 4
    $region25: #{forward.1} parent=1 // pred_fallthru
      _
    // Predicated region
    $region26: #{forward.1} parent=1 // pred_check
      _
    $region27: #{forward.1} parent=1 // pred_check_branch
      %67 = sbr.rel (0) target = $region29
    $region28: #{forward.1} parent=1 // pred_region
      _
    $region29: #{forward.1} parent=1 // pred_fallthru
      _
    // Predicated region
    $region30: #{forward.1} parent=1 // pred_check
      _
    $region31: #{forward.1} parent=1 // pred_check_branch
      %69 = sbr.rel (0) target = $region33
    $region32: #{forward.1} parent=1 // pred_region
      %70 = dma.done [#allocation3], 128
    $region33: #{forward.1} parent=1 // pred_fallthru
      _
    // Predicated region
    $region34: #{forward.1} parent=1 // pred_check
      _
    $region35: #{forward.1} parent=1 // pred_check_branch
      %72 = sbr.rel (0) target = $region37
    $region36: #{forward.1} parent=1 // pred_region
      %73 = dma.done [#allocation6], 256
    $region37: #{forward.1} parent=1 // pred_fallthru
      _
    // Predicated region
    $region38: #{forward.1} parent=1 // pred_check
      _
    $region39: #{forward.1} parent=1 // pred_check_branch
      %75 = sbr.rel (0) target = $region41
    $region40: #{forward.1} parent=1 // pred_region
      %76 = dma.done [#allocation6], 1024
    $region41: #{forward.1} parent=1 // pred_fallthru
      _
    // Predicated region
    $region42: #{forward.1} parent=1 // pred_check
      _
    $region43: #{forward.1} parent=1 // pred_check_branch
      %78 = sbr.rel (0) target = $region45
    $region44: #{forward.1} parent=1 // pred_region
      %79 = dma.done [#allocation9], 1024
    $region45: #{forward.1} parent=1 // pred_fallthru
      _
    %v81 = vld [vmem:[#allocation2] sm:$0xff]
    %v82 = vld [vmem:[#allocation5] sm:$0xf]
    %v83 = vld [vmem:[#allocation5 + $0x4] sm:$0xf]
    %v84 = vld [vmem:[#allocation5 + $0x8] sm:$0xf]
    %v85 = vld [vmem:[#allocation5 + $0xc] sm:$0xf]
    %v86 = vld [vmem:[%s2] sm:$0x1]
    %v87 = vpack.c.bf16 %v81, %v81
    %v89 = vlaneseq
    %v90 = vshrl.u32 %v89, 7
    %v91 = vsub.s32 0, %v90
    %v92 = vrot.slane %v86, %v91
    %v98 = vunpack.c.l.b16 %v82
    %v99 = vunpack.c.l.b16 %v83
    %v100 = vunpack.c.l.b16 %v84
    %v101 = vunpack.c.l.b16 %v85
    %v102 = vpack.c.b16 %v99, %v98
    %v103 = vpack.c.b16 %v101, %v100
    %vm106 = vcmask 261120
    %v108 = vsel %vm106, %v87, 0
    %110 = vmatprep.subr.bf16.mxu0 0
    %111 = vmatpush1.bf16.msra.mxu0 %v102
    %112 = vmatprep.subr.bf16.mxu0 0
    %113 = vmatpush1.bf16.msra.mxu0 %v103
    %114 = vmatprep.subr.bf16.mxu0 0
    %115 = vmatpush1.bf16.msra.mxu0 0
    %116 = vmatprep.subr.bf16.mxu0 0
    %117 = vmatpush1.bf16.msra.mxu0 0
    %118 = vmatprep.subr.bf16.mxu0 0
    %119 = vmatpush1.bf16.msra.mxu0 0
    %120 = vmatprep.subr.bf16.mxu0 0
    %121 = vmatpush1.bf16.msra.mxu0 0
    %122 = vmatprep.subr.bf16.mxu0 0
    %123 = vmatpush1.bf16.msra.mxu0 0
    %124 = vmatprep.subr.bf16.mxu0 0
    %125 = vmatpush1.bf16.msra.mxu0 0
    %126 = vmatprep.subr.bf16.mxu0 0
    %127 = vmatpush1.bf16.msra.mxu0 0
    %128 = vmatprep.subr.bf16.mxu0 0
    %129 = vmatpush1.bf16.msra.mxu0 0
    %130 = vmatprep.subr.bf16.mxu0 0
    %131 = vmatpush1.bf16.msra.mxu0 0
    %132 = vmatprep.subr.bf16.mxu0 0
    %133 = vmatpush1.bf16.msra.mxu0 0
    %134 = vmatprep.subr.bf16.mxu0 0
    %135 = vmatpush1.bf16.msra.mxu0 0
    %136 = vmatprep.subr.bf16.mxu0 0
    %137 = vmatpush1.bf16.msra.mxu0 0
    %138 = vmatprep.subr.bf16.mxu0 0
    %139 = vmatpush1.bf16.msra.mxu0 0
    %140 = vmatprep.subr.bf16.mxu0 0
    %141 = vmatpush1.bf16.msra.mxu0 0
    %142 = vmatprep.mubr.bf16.mxu0 0
    %143 = vmatmul.mubr.bf16.gmra.mrb[0].mxu0 %v108
    %v144 = vpop.f32.mrb[0].mxu0
    %v145 = vadd.f32 %v92, %v144
    %v146 = vpop.f32.mrb[0].mxu0
    %v147 = vpop.f32.mrb[0].mxu0
    %v148 = vpop.f32.mrb[0].mxu0
    %149 = vdwg.mxu0
    %v150 = vmax.f32 %v145, 0.0
    %v151 = vld [vmem:[#allocation7] sm:$0xf]
    %v152 = vld [vmem:[#allocation7 + $0x4] sm:$0xf]
    %v153 = vld [vmem:[#allocation7 + $0x8] sm:$0xf]
    %v154 = vld [vmem:[#allocation7 + $0xc] sm:$0xf]
    %v155 = vld [vmem:[#allocation7 + $0x10] sm:$0xf]
    %v156 = vld [vmem:[#allocation7 + $0x14] sm:$0xf]
    %v157 = vld [vmem:[#allocation7 + $0x18] sm:$0xf]
    %v158 = vld [vmem:[#allocation7 + $0x1c] sm:$0xf]
    %v159 = vld [vmem:[#allocation7 + $0x20] sm:$0xf]
    %v160 = vld [vmem:[#allocation7 + $0x24] sm:$0xf]
    %v161 = vld [vmem:[#allocation7 + $0x28] sm:$0xf]
    %v162 = vld [vmem:[#allocation7 + $0x2c] sm:$0xf]
    %v163 = vld [vmem:[#allocation7 + $0x30] sm:$0xf]
    %v164 = vld [vmem:[#allocation7 + $0x34] sm:$0xf]
    %v165 = vld [vmem:[#allocation7 + $0x38] sm:$0xf]
    %v166 = vld [vmem:[#allocation7 + $0x3c] sm:$0xf]
    %v167 = vld [vmem:[%s4] sm:$0x1]
    %v168 = vpack.c.bf16 %v150, %v150
    %v170 = vlaneseq
    %v171 = vshrl.u32 %v170, 7
    %v172 = vsub.s32 0, %v171
    %v173 = vrot.slane %v167, %v172
    %v191 = vunpack.c.l.b16 %v151
    %v192 = vunpack.c.l.b16 %v152
    %v193 = vunpack.c.l.b16 %v153
    %v194 = vunpack.c.l.b16 %v154
    %v195 = vunpack.c.l.b16 %v155
    %v196 = vunpack.c.l.b16 %v156
    %v197 = vunpack.c.l.b16 %v157
    %v198 = vunpack.c.l.b16 %v158
    %v199 = vunpack.c.l.b16 %v159
    %v200 = vunpack.c.l.b16 %v160
    %v201 = vunpack.c.l.b16 %v161
    %v202 = vunpack.c.l.b16 %v162
    %v203 = vunpack.c.l.b16 %v163
    %v204 = vunpack.c.l.b16 %v164
    %v205 = vunpack.c.l.b16 %v165
    %v206 = vunpack.c.l.b16 %v166
    %v207 = vpack.c.b16 %v192, %v191
    %v208 = vpack.c.b16 %v194, %v193
    %v209 = vpack.c.b16 %v196, %v195
    %v210 = vpack.c.b16 %v198, %v197
    %v211 = vpack.c.b16 %v200, %v199
    %v212 = vpack.c.b16 %v202, %v201
    %v213 = vpack.c.b16 %v204, %v203
    %v214 = vpack.c.b16 %v206, %v205
    %223 = vmatprep.subr.bf16.mxu0 0
    %224 = vmatpush1.bf16.msra.mxu0 %v207
    %225 = vmatprep.subr.bf16.mxu0 0
    %226 = vmatpush1.bf16.msra.mxu0 %v208
    %227 = vmatprep.subr.bf16.mxu0 0
    %228 = vmatpush1.bf16.msra.mxu0 %v209
    %229 = vmatprep.subr.bf16.mxu0 0
    %230 = vmatpush1.bf16.msra.mxu0 %v210
    %231 = vmatprep.subr.bf16.mxu0 0
    %232 = vmatpush1.bf16.msra.mxu0 %v211
    %233 = vmatprep.subr.bf16.mxu0 0
    %234 = vmatpush1.bf16.msra.mxu0 %v212
    %235 = vmatprep.subr.bf16.mxu0 0
    %236 = vmatpush1.bf16.msra.mxu0 %v213
    %237 = vmatprep.subr.bf16.mxu0 0
    %238 = vmatpush1.bf16.msra.mxu0 %v214
    %239 = vmatprep.subr.bf16.mxu0 0
    %240 = vmatpush1.bf16.msra.mxu0 0
    %241 = vmatprep.subr.bf16.mxu0 0
    %242 = vmatpush1.bf16.msra.mxu0 0
    %243 = vmatprep.subr.bf16.mxu0 0
    %244 = vmatpush1.bf16.msra.mxu0 0
    %245 = vmatprep.subr.bf16.mxu0 0
    %246 = vmatpush1.bf16.msra.mxu0 0
    %247 = vmatprep.subr.bf16.mxu0 0
    %248 = vmatpush1.bf16.msra.mxu0 0
    %249 = vmatprep.subr.bf16.mxu0 0
    %250 = vmatpush1.bf16.msra.mxu0 0
    %251 = vmatprep.subr.bf16.mxu0 0
    %252 = vmatpush1.bf16.msra.mxu0 0
    %253 = vmatprep.subr.bf16.mxu0 0
    %254 = vmatpush1.bf16.msra.mxu0 0
    %255 = vmatprep.mubr.bf16.mxu0 0
    %256 = vmatmul.mubr.bf16.gmra.mrb[0].mxu0 %v168
    %v257 = vpop.f32.mrb[0].mxu0
    %v258 = vadd.f32 %v173, %v257
    %v259 = vpop.f32.mrb[0].mxu0
    %v260 = vpop.f32.mrb[0].mxu0
    %v261 = vpop.f32.mrb[0].mxu0
    %262 = vdwg.mxu0
    %v263 = vmax.f32 %v258, 0.0
    %v264 = vld [vmem:[#allocation8] sm:$0xf]
    %v265 = vld [vmem:[#allocation8 + $0x4] sm:$0xf]
    %v266 = vld [vmem:[#allocation8 + $0x8] sm:$0xf]
    %v267 = vld [vmem:[#allocation8 + $0xc] sm:$0xf]
    %v268 = vld [vmem:[#allocation8 + $0x10] sm:$0xf]
    %v269 = vld [vmem:[#allocation8 + $0x14] sm:$0xf]
    %v270 = vld [vmem:[#allocation8 + $0x18] sm:$0xf]
    %v271 = vld [vmem:[#allocation8 + $0x1c] sm:$0xf]
    %v272 = vld [vmem:[#allocation8 + $0x20] sm:$0xf]
    %v273 = vld [vmem:[#allocation8 + $0x24] sm:$0xf]
    %v274 = vld [vmem:[#allocation8 + $0x28] sm:$0xf]
    %v275 = vld [vmem:[#allocation8 + $0x2c] sm:$0xf]
    %v276 = vld [vmem:[#allocation8 + $0x30] sm:$0xf]
    %v277 = vld [vmem:[#allocation8 + $0x34] sm:$0xf]
    %v278 = vld [vmem:[#allocation8 + $0x38] sm:$0xf]
    %v279 = vld [vmem:[#allocation8 + $0x3c] sm:$0xf]
    %v280 = vld [vmem:[%s6] sm:$0x1]
    %v281 = vpack.c.bf16 %v263, %v263
    %v283 = vlaneseq
    %v284 = vshrl.u32 %v283, 7
    %v285 = vsub.s32 0, %v284
    %v286 = vrot.slane %v280, %v285
    %v304 = vunpack.c.l.b16 %v264
    %v305 = vunpack.c.l.b16 %v265
    %v306 = vunpack.c.l.b16 %v266
    %v307 = vunpack.c.l.b16 %v267
    %v308 = vunpack.c.l.b16 %v268
    %v309 = vunpack.c.l.b16 %v269
    %v310 = vunpack.c.l.b16 %v270
    %v311 = vunpack.c.l.b16 %v271
    %v312 = vunpack.c.l.b16 %v272
    %v313 = vunpack.c.l.b16 %v273
    %v314 = vunpack.c.l.b16 %v274
    %v315 = vunpack.c.l.b16 %v275
    %v316 = vunpack.c.l.b16 %v276
    %v317 = vunpack.c.l.b16 %v277
    %v318 = vunpack.c.l.b16 %v278
    %v319 = vunpack.c.l.b16 %v279
    %v320 = vpack.c.b16 %v305, %v304
    %v321 = vpack.c.b16 %v307, %v306
    %v322 = vpack.c.b16 %v309, %v308
    %v323 = vpack.c.b16 %v311, %v310
    %v324 = vpack.c.b16 %v313, %v312
    %v325 = vpack.c.b16 %v315, %v314
    %v326 = vpack.c.b16 %v317, %v316
    %v327 = vpack.c.b16 %v319, %v318
    %336 = vmatprep.subr.bf16.mxu0 0
    %337 = vmatpush1.bf16.msra.mxu0 %v320
    %338 = vmatprep.subr.bf16.mxu0 0
    %339 = vmatpush1.bf16.msra.mxu0 %v321
    %340 = vmatprep.subr.bf16.mxu0 0
    %341 = vmatpush1.bf16.msra.mxu0 %v322
    %342 = vmatprep.subr.bf16.mxu0 0
    %343 = vmatpush1.bf16.msra.mxu0 %v323
    %344 = vmatprep.subr.bf16.mxu0 0
    %345 = vmatpush1.bf16.msra.mxu0 %v324
    %346 = vmatprep.subr.bf16.mxu0 0
    %347 = vmatpush1.bf16.msra.mxu0 %v325
    %348 = vmatprep.subr.bf16.mxu0 0
    %349 = vmatpush1.bf16.msra.mxu0 %v326
    %350 = vmatprep.subr.bf16.mxu0 0
    %351 = vmatpush1.bf16.msra.mxu0 %v327
    %352 = vmatprep.subr.bf16.mxu0 0
    %353 = vmatpush1.bf16.msra.mxu0 0
    %354 = vmatprep.subr.bf16.mxu0 0
    %355 = vmatpush1.bf16.msra.mxu0 0
    %356 = vmatprep.subr.bf16.mxu0 0
    %357 = vmatpush1.bf16.msra.mxu0 0
    %358 = vmatprep.subr.bf16.mxu0 0
    %359 = vmatpush1.bf16.msra.mxu0 0
    %360 = vmatprep.subr.bf16.mxu0 0
    %361 = vmatpush1.bf16.msra.mxu0 0
    %362 = vmatprep.subr.bf16.mxu0 0
    %363 = vmatpush1.bf16.msra.mxu0 0
    %364 = vmatprep.subr.bf16.mxu0 0
    %365 = vmatpush1.bf16.msra.mxu0 0
    %366 = vmatprep.subr.bf16.mxu0 0
    %367 = vmatpush1.bf16.msra.mxu0 0
    %368 = vmatprep.mubr.bf16.mxu0 0
    %369 = vmatmul.mubr.bf16.gmra.mrb[0].mxu0 %v281
    %v370 = vpop.f32.mrb[0].mxu0
    %v371 = vadd.f32 %v286, %v370
    %v372 = vpop.f32.mrb[0].mxu0
    %v373 = vpop.f32.mrb[0].mxu0
    %v374 = vpop.f32.mrb[0].mxu0
    %375 = vdwg.mxu0
    %v376 = vlaneseq
    %v377 = vand.u32 %v376, 127
    %vm378 = vcmp.lt.s32.totalorder %v377, 16
    %v379 = vsel %vm378, %v371, -1e+30
    %380 = vmax.xlane.f32.xlu0 %v379
    %v381 = vpop.xlane.xlu0 %380
    %v382 = vsub.f32 %v379, %v381
    %v383 = vmul.f32 %v382, 1.442695
    %v384 = vpow.pop %v383
    %385 = vadd.xlane.f32.xlu0 %v384
    %v386 = vpop.xlane.xlu0 %385
    %v387 = vlog2.pop %v386
    %v388 = vmul.f32 %v387, 0.6931472
    %v389 = vsub.f32 %v382, %v388
    %390 = vst [vmem:[#allocation10] sm:$0xff] %v389
    // Predicated region
    $region46: #{forward.1} parent=1 // pred_check
      _
    $region47: #{forward.1} parent=1 // pred_check_branch
      %392 = sbr.rel (0) target = $region49
    $region48: #{forward.1} parent=1 // pred_region
      %s394 = ssub.s32 128, 128
      %395 = vsyncadd [#allocation4], %s394
      %s397 = sshll.u32 [#allocation10], 4
      %s398 = int_to_ptr.vmem [resolvable:$true] %s397
      %400 = dma.vmem_to_hbm [thread:$0]  %s398, 128, %s7, [#allocation4]
    $region49: #{forward.1} parent=1 // pred_fallthru
      _
    // Predicated region
    $region50: #{forward.1} parent=1 // pred_check
      _
    $region51: #{forward.1} parent=1 // pred_check_branch
      %402 = sbr.rel (0) target = $region53
    $region52: #{forward.1} parent=1 // pred_region
      %403 = dma.done [#allocation4], 128
    $region53: #{forward.1} parent=1 // pred_fallthru
      _
    %404 = vsyncpa [#allocation3], 1
    %405 = vsyncpa [#allocation6], 1
    %406 = vsyncpa [#allocation9], 1
    %407 = vsyncpa [#allocation4], 1

</llo_original>
